<compile_context>
chip_gen: v7x
topology: tpu7x:2x2x1
jax: 0.10.0
libtpu: 0.0.40
codegen_flags: <defaults>
</compile_context>

<pallas_src>
import jax
import jax.numpy as jnp
from jax.experimental import pallas as pl
from jax.experimental.pallas import tpu as pltpu


def _int8_linear_kernel(x_ref, w_ref, s_ref, o_ref, acc_ref):
    # x_ref:   (tm, tk) activations (bf16/f32)
    # w_ref:   (tk, tn) int8 weights (pre-transposed to (K, N))
    # s_ref:   (1, tn)  per-out-channel scales (bf16)
    # o_ref:   (tm, tn) output tile (x dtype)
    # acc_ref: (tm, tn) f32 accumulator, resident across the K grid axis
    k = pl.program_id(2)

    @pl.when(k == 0)
    def _init():
        acc_ref[...] = jnp.zeros_like(acc_ref)

    x = x_ref[...]
    w = w_ref[...].astype(x.dtype)  # weight.to(input.dtype), per-K chunk
    acc_ref[...] += jnp.dot(x, w, preferred_element_type=jnp.float32)

    @pl.when(k == pl.num_programs(2) - 1)
    def _finalize():
        # Scale in f32 on the accumulator; single downcast to the output dtype.
        o_ref[...] = (acc_ref[...] * s_ref[...].astype(jnp.float32)).astype(o_ref.dtype)


def weight_only_int8_linear(x, weight_int8, scales):
    """x: (..., K) bf16/f32; weight_int8: (N, K) int8; scales: (N,) bf16."""
    *lead, K = x.shape
    N, K_w = weight_int8.shape
    assert K == K_w, (K, K_w)

    M = 1
    for d in lead:
        M *= d
    x2d = x.reshape(M, K)

    # One-time relayout of the static weight to (K, N).  In production this is
    # done once at quantization / weight-load time, not per forward call.
    w_kn = weight_int8.T
    scales2d = scales.reshape(1, N)

    # ---------------- tile selection ----------------
    # M tile: full extent for small M, else 256 (fills v6e/v7x 256-wide MXU).
    tm = M if M <= 256 else 256

    # N tile: cap at 512.  For tiny-M (decode) shapes split N so at least two
    # "parallel" blocks exist (v7x megacore has 2 TensorCores), lane-aligned.
    if N <= 128:
        tn = N
    elif M <= 16:
        tn = min(512, 128 * pl.cdiv(N, 2 * 128))
    else:
        tn = N if N <= 512 else 512

    # K tile: full K when small; otherwise 2048-wide chunks.  Ragged K is
    # zero-padded (zeros contribute nothing to the accumulator).
    tk_target = 2048
    if K <= tk_target:
        tk, Kp = K, K
    else:
        tk = tk_target
        Kp = tk * pl.cdiv(K, tk)
        if Kp != K:
            x2d = jnp.pad(x2d, ((0, 0), (0, Kp - K)))
            w_kn = jnp.pad(w_kn, ((0, Kp - K), (0, 0)))

    grid = (pl.cdiv(M, tm), pl.cdiv(N, tn), Kp // tk)

    # Decode (small M) is pure HBM bandwidth on the int8 weights: buffer the
    # weight stream 3-deep when there are enough K steps to pipeline.
    use_buffered = (M <= 64) and (grid[2] >= 3)
    if use_buffered:
        w_spec = pl.BlockSpec((tk, tn), lambda i, j, k: (k, j),
                              pipeline_mode=pl.Buffered(3))
    else:
        w_spec = pl.BlockSpec((tk, tn), lambda i, j, k: (k, j))

    # ---------------- explicit VMEM budget ----------------
    x_bytes = x2d.dtype.itemsize
    o_bytes = x.dtype.itemsize
    n_wbuf = 3 if use_buffered else 2
    vmem_need = (
        2 * tm * tk * x_bytes        # activation double-buffer
        + n_wbuf * tk * tn           # int8 weight buffers
        + tk * tn * x_bytes          # per-chunk weight cast temp
        + tm * tn * 4                # f32 accumulator scratch
        + 2 * tm * tn * o_bytes      # output double-buffer
        + 2 * 8 * tn * 2             # scales (sublane-padded)
    )
    vmem_limit = int(min(max(2 * vmem_need, 32 * 1024 * 1024), 48 * 1024 * 1024))

    cost = pl.CostEstimate(
        flops=2 * M * N * K,
        transcendentals=0,
        bytes_accessed=M * K * x_bytes + N * K + N * 2 + M * N * o_bytes,
    )

    out2d = pl.pallas_call(
        _int8_linear_kernel,
        out_shape=jax.ShapeDtypeStruct((M, N), x.dtype),
        grid_spec=pltpu.PrefetchScalarGridSpec(
            num_scalar_prefetch=0,
            grid=grid,
            in_specs=[
                pl.BlockSpec((tm, tk), lambda i, j, k: (i, k)),   # activations
                w_spec,                                           # int8 weights (K, N)
                pl.BlockSpec((1, tn), lambda i, j, k: (0, j)),    # scales
            ],
            out_specs=pl.BlockSpec((tm, tn), lambda i, j, k: (i, j)),
            scratch_shapes=[pltpu.VMEM((tm, tn), jnp.float32)],
        ),
        compiler_params=pltpu.CompilerParams(
            dimension_semantics=("parallel", "parallel", "arbitrary"),
            vmem_limit_bytes=vmem_limit,
        ),
        cost_estimate=cost,
    )(x2d, w_kn, scales2d)

    return out2d.reshape(*lead, N)


if __name__ == "__main__":
    # Small shapes consistent with the module: batch=2, seq=8, hidden=32 -> out=64
    batch, seq, in_features, out_features = 2, 8, 32, 64

    key = jax.random.PRNGKey(0)
    k_x, k_w, k_s = jax.random.split(key, 3)

    x = jax.random.normal(k_x, (batch, seq, in_features), dtype=jnp.float32).astype(jnp.bfloat16)
    weight = jax.random.randint(
        k_w, (out_features, in_features), -128, 128, dtype=jnp.int32
    ).astype(jnp.int8)
    scales = (jax.random.uniform(k_s, (out_features,), dtype=jnp.float32) * 0.05 + 0.01).astype(
        jnp.bfloat16
    )

    y = weight_only_int8_linear(x, weight, scales)
    y = jax.block_until_ready(y)

    # Pure-JAX reference with the same math (f32 accumulation + f32 scaling,
    # single bf16 downcast — matches the kernel epilogue).
    ref = (
        jnp.einsum(
            "bsk,nk->bsn",
            x.astype(jnp.float32),
            weight.astype(jnp.float32),
        )
        * scales.astype(jnp.float32)
    ).astype(jnp.bfloat16)

    assert y.shape == (batch, seq, out_features)
    assert y.dtype == jnp.bfloat16
    assert jnp.allclose(y.astype(jnp.float32), ref.astype(jnp.float32), atol=1e-1, rtol=1e-2)

    print("KERNEL_OK")
</pallas_src>

<mosaic_0001>
module attributes {stable_mosaic.version = 11 : i64} {
  func.func @_int8_linear_kernel(%arg0: i32, %arg1: i32, %arg2: i32, %arg3: memref<16x32xbf16, #tpu.memory_space<vmem>>, %arg4: memref<32x64xi8, #tpu.memory_space<vmem>>, %arg5: memref<1x64xbf16, #tpu.memory_space<vmem>>, %arg6: memref<16x64xbf16, #tpu.memory_space<vmem>>, %arg7: memref<16x64xf32, #tpu.memory_space<vmem>>) attributes {dimension_semantics = [#tpu.dimension_semantics<parallel>, #tpu.dimension_semantics<parallel>, #tpu.dimension_semantics<arbitrary>], iteration_bounds = array<i64: 1, 1, 1>, scalar_prefetch = 0 : i64, scratch_operands = 1 : i64, tpu.core_type = #tpu.core_type<tc>, window_params = [{transform_indices = @transform_0, window_bounds = array<i64: 16, 32>}, {transform_indices = @transform_1, window_bounds = array<i64: 32, 64>}, {transform_indices = @transform_2, window_bounds = array<i64: 1, 64>}, {transform_indices = @transform_3, window_bounds = array<i64: 16, 64>}]} {
    %c0_i32 = arith.constant 0 : i32
    %0 = arith.cmpi eq, %arg2, %c0_i32 : i32
    %1 = arith.extui %0 : i1 to i32
    %c0_i32_0 = arith.constant 0 : i32
    %2 = arith.cmpi ne, %1, %c0_i32_0 : i32
    scf.if %2 {
      %cst_10 = arith.constant 0.000000e+00 : f32
      %13 = vector.broadcast %cst_10 : f32 to vector<16x64xf32>
      %c0_11 = arith.constant 0 : index
      %c0_12 = arith.constant 0 : index
      %14 = vector.load %arg7[%c0_11, %c0_12] : memref<16x64xf32, #tpu.memory_space<vmem>>, vector<16x64xf32>
      tpu.vector_store %arg7[%c0_11, %c0_12], %13 {strides = array<i32>} : memref<16x64xf32, #tpu.memory_space<vmem>>, vector<16x64xf32>,
    } else {
    }
    %c0 = arith.constant 0 : index
    %c0_1 = arith.constant 0 : index
    %3 = vector.load %arg3[%c0, %c0_1] : memref<16x32xbf16, #tpu.memory_space<vmem>>, vector<16x32xbf16>
    %c0_2 = arith.constant 0 : index
    %c0_3 = arith.constant 0 : index
    %4 = vector.load %arg4[%c0_2, %c0_3] : memref<32x64xi8, #tpu.memory_space<vmem>>, vector<32x64xi8>
    %5 = arith.sitofp %4 : vector<32x64xi8> to vector<32x64xbf16>
    %c0_4 = arith.constant 0 : index
    %c0_5 = arith.constant 0 : index
    %6 = vector.load %arg7[%c0_4, %c0_5] : memref<16x64xf32, #tpu.memory_space<vmem>>, vector<16x64xf32>
    %cst = arith.constant dense<0.000000e+00> : vector<16x64xf32>
    %7 = tpu.matmul %3, %5, %cst {dimension_numbers = #tpu.dot_dimension_numbers<[1], [0], [0], [1], [0, 0, 1, 1], [], []>} : vector<16x32xbf16>, vector<32x64xbf16>, vector<16x64xf32> -> vector<16x64xf32>
    %8 = arith.addf %6, %7 : vector<16x64xf32>
    %c0_6 = arith.constant 0 : index
    %c0_7 = arith.constant 0 : index
    %9 = vector.load %arg7[%c0_6, %c0_7] : memref<16x64xf32, #tpu.memory_space<vmem>>, vector<16x64xf32>
    tpu.vector_store %arg7[%c0_6, %c0_7], %8 {strides = array<i32>} : memref<16x64xf32, #tpu.memory_space<vmem>>, vector<16x64xf32>,
    %c0_i32_8 = arith.constant 0 : i32
    %10 = arith.cmpi eq, %arg2, %c0_i32_8 : i32
    %11 = arith.extui %10 : i1 to i32
    %c0_i32_9 = arith.constant 0 : i32
    %12 = arith.cmpi ne, %11, %c0_i32_9 : i32
    scf.if %12 {
      %c0_10 = arith.constant 0 : index
      %c0_11 = arith.constant 0 : index
      %13 = vector.load %arg7[%c0_10, %c0_11] : memref<16x64xf32, #tpu.memory_space<vmem>>, vector<16x64xf32>
      %c0_12 = arith.constant 0 : index
      %c0_13 = arith.constant 0 : index
      %14 = vector.load %arg5[%c0_12, %c0_13] : memref<1x64xbf16, #tpu.memory_space<vmem>>, vector<1x64xbf16>
      %15 = arith.extf %14 : vector<1x64xbf16> to vector<1x64xf32>
      %16 = vector.broadcast %15 : vector<1x64xf32> to vector<16x64xf32>
      %17 = arith.mulf %13, %16 : vector<16x64xf32>
      %18 = arith.truncf %17 : vector<16x64xf32> to vector<16x64xbf16>
      %c0_14 = arith.constant 0 : index
      %c0_15 = arith.constant 0 : index
      %19 = vector.load %arg6[%c0_14, %c0_15] : memref<16x64xbf16, #tpu.memory_space<vmem>>, vector<16x64xbf16>
      tpu.vector_store %arg6[%c0_14, %c0_15], %18 {strides = array<i32>} : memref<16x64xbf16, #tpu.memory_space<vmem>>, vector<16x64xbf16>,
    } else {
    }
    return
  }
  func.func @transform_0(%arg0: i32, %arg1: i32, %arg2: i32) -> (i32, i32) {
    %c0_i32 = arith.constant 0 : i32
    return %arg0, %arg2 : i32, i32
  }
  func.func @transform_1(%arg0: i32, %arg1: i32, %arg2: i32) -> (i32, i32) {
    %c0_i32 = arith.constant 0 : i32
    return %arg2, %arg1 : i32, i32
  }
  func.func @transform_2(%arg0: i32, %arg1: i32, %arg2: i32) -> (i32, i32) {
    %c0_i32 = arith.constant 0 : i32
    %c0_i32_0 = arith.constant 0 : i32
    return %c0_i32, %arg1 : i32, i32
  }
  func.func @transform_3(%arg0: i32, %arg1: i32, %arg2: i32) -> (i32, i32) {
    %c0_i32 = arith.constant 0 : i32
    return %arg0, %arg1 : i32, i32
  }
}

</mosaic_0001>

<llo_original>
// kernel: tpu_custom_call.1
$region0: #{tpu_custom_call.1}
  #allocation0 [shape = 'u32[]', space=smem, size = 0x4, offset = 0x4, fixed_abs, tag = 'smem constant byte address 0x4 - core index']
  #allocation1 [shape = 'u32[144,128]{1,0:T(1,128)}', space=vmem, size = 0x12000, scoped, tag = 'internal scratch']
  #allocation2 [shape = 'f32[16,64]{1,0:T(8,128)}', space=vmem, size = 0x2000, scoped, tag = 'scratch operand']
  %s0 = inlined_call_operand.hbm [shape: bf16[16,32], index: 0, kind: input, shape index: {}]
  %s1 = inlined_call_operand.hbm [shape: s8[32,64], index: 1, kind: input, shape index: {}]
  %s2 = inlined_call_operand.vmem [shape: bf16[1,64], index: 2, kind: input, shape index: {}]
  %s3 = inlined_call_operand.hbm [shape: bf16[16,64], index: 3, kind: output, shape index: {}]
  %s4 = sld [smem:[#allocation0]]
  $region38: #{tpu_custom_call.1} parent=0
    _
  %s6 = ssub.s32 1, %s4
  %s7 = scalar_select 0, %s6, %s4
  $region1: #{tpu_custom_call.1} parent=0
    #allocation3 [shape = 'u8[4096]{0}', space=vmem, size = 0x1000, scoped, tag = 'input window, operand 0, single buffered']
    #allocation4 [shape = 's32[1]{0}', space=sflag, size = 0x4, scoped, tag = 'scoped memory for tpu_custom_call.1']
    #allocation5 [shape = 's32[1]{0}', space=sflag, size = 0x4, scoped, tag = 'scoped memory for tpu_custom_call.1']
    #allocation6 [shape = 'u8[4096]{0}', space=vmem, size = 0x1000, scoped, tag = 'input window, operand 1, single buffered']
    #allocation7 [shape = 's32[1]{0}', space=sflag, size = 0x4, scoped, tag = 'scoped memory for tpu_custom_call.1']
    #allocation8 [shape = 'u8[4096]{0}', space=vmem, size = 0x1000, scoped, tag = 'output window, operand 0, single buffered']
    %8 = vsyncpa [#allocation4], 0
    %9 = vsyncpa [#allocation7], 0
    %10 = vsyncpa [#allocation5], 0
    // Predicated region
    $region2: #{tpu_custom_call.1} parent=1 // pred_check
      _
    $region3: #{tpu_custom_call.1} parent=1 // pred_check_branch
      %12 = sbr.rel (0) target = $region5
    $region4: #{tpu_custom_call.1} parent=1 // pred_region
      %s14 = ssub.s32 128, 128
      %15 = vsyncadd [#allocation4], %s14
      %s16 = sshll.u32 [#allocation3], 4
      %s17 = int_to_ptr.vmem [resolvable:$true] %s16
      %22 = dma.hbm_to_vmem [thread:$0]  %s0, 128, %s17, [#allocation4], 64, 64, 4
    $region5: #{tpu_custom_call.1} parent=1 // pred_fallthru
      _
    // Predicated region
    $region6: #{tpu_custom_call.1} parent=1 // pred_check
      _
    $region7: #{tpu_custom_call.1} parent=1 // pred_check_branch
      %24 = sbr.rel (0) target = $region9
    $region8: #{tpu_custom_call.1} parent=1 // pred_region
      %s26 = ssub.s32 128, 128
      %27 = vsyncadd [#allocation7], %s26
      %s29 = sshll.u32 [#allocation6], 4
      %s30 = int_to_ptr.vmem [resolvable:$true] %s29
      %32 = dma.hbm_to_vmem [thread:$0]  %s1, 128, %s30, [#allocation7]
    $region9: #{tpu_custom_call.1} parent=1 // pred_fallthru
      _
    // Predicated region
    $region10: #{tpu_custom_call.1} parent=1 // pred_check
      _
    $region11: #{tpu_custom_call.1} parent=1 // pred_check_branch
      %34 = sbr.rel (0) target = $region13
    $region12: #{tpu_custom_call.1} parent=1 // pred_region
      _
    $region13: #{tpu_custom_call.1} parent=1 // pred_fallthru
      _
    // Predicated region
    $region14: #{tpu_custom_call.1} parent=1 // pred_check
      _
    $region15: #{tpu_custom_call.1} parent=1 // pred_check_branch
      %36 = sbr.rel (0) target = $region17
    $region16: #{tpu_custom_call.1} parent=1 // pred_region
      %37 = dma.done [#allocation4], 128
    $region17: #{tpu_custom_call.1} parent=1 // pred_fallthru
      _
    // Predicated region
    $region18: #{tpu_custom_call.1} parent=1 // pred_check
      _
    $region19: #{tpu_custom_call.1} parent=1 // pred_check_branch
      %39 = sbr.rel (0) target = $region21
    $region20: #{tpu_custom_call.1} parent=1 // pred_region
      %40 = dma.done [#allocation7], 128
    $region21: #{tpu_custom_call.1} parent=1 // pred_fallthru
      _
    %p42 = scmp.eq.s32.totalorder 0, 0
    // Predicated region
    $region22: #{tpu_custom_call.1} parent=1 // pred_check
      %p43 = pneg %p42
    $region23: #{tpu_custom_call.1} parent=1 // pred_check_branch
      %45 = sbr.rel (%p43) target = $region25
    $region24: #{tpu_custom_call.1} parent=1 // pred_region
      %vm46 = vcmask 523264
      %47 = vst.msk [vmem:[#allocation2] sm:$0xff] %vm46, 0.0
      %48 = vst.msk [vmem:[#allocation2 + $0x8] sm:$0xff] %vm46, 0.0
    $region25: #{tpu_custom_call.1} parent=1 // pred_fallthru
      _
    %v49 = vld [vmem:[#allocation3] sm:$0xf]
    %v50 = vld [vmem:[#allocation3 + $0x4] sm:$0xf]
    %v51 = vld [vmem:[#allocation6] sm:$0xff]
    %v52 = vunpack.c.l.s8.bf16 %v51
    %v53 = vunpack.c.h.s8.bf16 %v51
    %v54 = vld [vmem:[#allocation2] sm:$0xff]
    %v55 = vld [vmem:[#allocation2 + $0x8] sm:$0xff]
    %v58 = vunpack.c.l.b16 %v49
    %v59 = vunpack.c.l.b16 %v50
    %v60 = vpack.c.b16 %v59, %v58
    %vm61 = vcmask 261120
    %v63 = vsel %vm61, %v60, 0
    %65 = vmatprep.subr.bf16.mxu0 0
    %66 = vmatpush1.bf16.msra.mxu0 %v52
    %67 = vmatprep.subr.bf16.mxu0 0
    %68 = vmatpush1.bf16.msra.mxu0 %v53
    %69 = vmatprep.subr.bf16.mxu0 0
    %70 = vmatpush1.bf16.msra.mxu0 0
    %71 = vmatprep.subr.bf16.mxu0 0
    %72 = vmatpush1.bf16.msra.mxu0 0
    %73 = vmatprep.subr.bf16.mxu0 0
    %74 = vmatpush1.bf16.msra.mxu0 0
    %75 = vmatprep.subr.bf16.mxu0 0
    %76 = vmatpush1.bf16.msra.mxu0 0
    %77 = vmatprep.subr.bf16.mxu0 0
    %78 = vmatpush1.bf16.msra.mxu0 0
    %79 = vmatprep.subr.bf16.mxu0 0
    %80 = vmatpush1.bf16.msra.mxu0 0
    %81 = vmatprep.subr.bf16.mxu0 0
    %82 = vmatpush1.bf16.msra.mxu0 0
    %83 = vmatprep.subr.bf16.mxu0 0
    %84 = vmatpush1.bf16.msra.mxu0 0
    %85 = vmatprep.subr.bf16.mxu0 0
    %86 = vmatpush1.bf16.msra.mxu0 0
    %87 = vmatprep.subr.bf16.mxu0 0
    %88 = vmatpush1.bf16.msra.mxu0 0
    %89 = vmatprep.subr.bf16.mxu0 0
    %90 = vmatpush1.bf16.msra.mxu0 0
    %91 = vmatprep.subr.bf16.mxu0 0
    %92 = vmatpush1.bf16.msra.mxu0 0
    %93 = vmatprep.subr.bf16.mxu0 0
    %94 = vmatpush1.bf16.msra.mxu0 0
    %95 = vmatprep.subr.bf16.mxu0 0
    %96 = vmatpush1.bf16.msra.mxu0 0
    %97 = vmatprep.mubr.bf16.mxu0 0
    %98 = vmatmul.mubr.bf16.gmra.mrb[0].mxu0 %v63
    %v99 = vpop.f32.mrb[0].mxu0
    %v100 = vadd.f32 0.0, %v99
    %v101 = vpop.f32.mrb[0].mxu0
    %v102 = vpop.f32.mrb[0].mxu0
    %v103 = vadd.f32 0.0, %v102
    %v104 = vpop.f32.mrb[0].mxu0
    %105 = vdwg.mxu0
    %v106 = vadd.f32 %v54, %v100
    %v107 = vadd.f32 %v55, %v103
    %vm108 = vcmask 523264
    %109 = vst.msk [vmem:[#allocation2] sm:$0xff] %vm108, %v106
    %110 = vst.msk [vmem:[#allocation2 + $0x8] sm:$0xff] %vm108, %v107
    // Predicated region
    $region26: #{tpu_custom_call.1} parent=1 // pred_check
      %p111 = pneg %p42
    $region27: #{tpu_custom_call.1} parent=1 // pred_check_branch
      %113 = sbr.rel (%p111) target = $region29
    $region28: #{tpu_custom_call.1} parent=1 // pred_region
      %v114 = vld [vmem:[#allocation2] sm:$0xff]
      %v115 = vld [vmem:[#allocation2 + $0x8] sm:$0xff]
      %v116 = vld [vmem:[%s2] sm:$0x1]
      %v117 = vunpack.c.l.bf16 %v116
      %v118 = vlaneseq
      %v119 = vshrl.u32 %v118, 7
      %v120 = vsub.s32 0, %v119
      %v121 = vrot.slane %v117, %v120
      %v122 = vmul.f32 %v114, %v121
      %v123 = vmul.f32 %v115, %v121
      %v124 = vpack.c.bf16 %v123, %v122
      %v126 = vunpack.c.l.b16 %v124
      %v127 = vunpack.c.h.b16 %v124
      %v128 = vpack.c.b16 %v126, %v126
      %v129 = vpack.c.b16 %v127, %v127
      %vm132 = vcmask 519168
      %133 = vst.msk [vmem:[#allocation8] sm:$0xf] %vm132, %v128
      %134 = vst.msk [vmem:[#allocation8 + $0x4] sm:$0xf] %vm132, %v129
    $region29: #{tpu_custom_call.1} parent=1 // pred_fallthru
      _
    // Predicated region
    $region30: #{tpu_custom_call.1} parent=1 // pred_check
      _
    $region31: #{tpu_custom_call.1} parent=1 // pred_check_branch
      %136 = sbr.rel (0) target = $region33
    $region32: #{tpu_custom_call.1} parent=1 // pred_region
      %s138 = ssub.s32 128, 128
      %139 = vsyncadd [#allocation5], %s138
      %s140 = sshll.u32 [#allocation8], 4
      %s141 = int_to_ptr.vmem [resolvable:$true] %s140
      %146 = dma.vmem_to_hbm [thread:$0]  %s141, 128, %s3, [#allocation5], 64, 64, 4
    $region33: #{tpu_custom_call.1} parent=1 // pred_fallthru
      _
    // Predicated region
    $region34: #{tpu_custom_call.1} parent=1 // pred_check
      _
    $region35: #{tpu_custom_call.1} parent=1 // pred_check_branch
      %148 = sbr.rel (0) target = $region37
    $region36: #{tpu_custom_call.1} parent=1 // pred_region
      %149 = dma.done [#allocation5], 128
    $region37: #{tpu_custom_call.1} parent=1 // pred_fallthru
      _
    %150 = vsyncpa [#allocation4], 1
    %151 = vsyncpa [#allocation7], 1
    %152 = vsyncpa [#allocation5], 1

</llo_original>
